<compile_context>
chip_gen: v6e
topology: v6e:2x2x1
jax: 0.10.0
libtpu: 0.0.40
codegen_flags: <defaults>
</compile_context>

<pallas_src>
import functools

import jax
import jax.numpy as jnp
from jax.experimental import pallas as pl
from jax.experimental.pallas import tpu as pltpu

Depth = 9
FILTER_LENGTH = 51
PROBABILITY = 0.5


def _round_up(n, m):
    return ((n + m - 1) // m) * m


def _vmem_budget_bytes():
    """Physical VMEM minus headroom for compiler-internal scratch."""
    try:
        cap = int(pltpu.get_tpu_info().vmem_capacity_bytes)
    except Exception:
        cap = 64 << 20                       # v7x-safe fallback
    return max(cap - (16 << 20), 16 << 20)


def _vmem_limit(step_bytes, budget):
    need = 2 * step_bytes + (8 << 20)        # double-buffered blocks + slack
    return int(min(max(need, 32 << 20), budget))


def _toeplitz_main(wb, tile_h):
    """T[d, j, h] = ker[d, j-h] for 0 <= j-h < K else 0; shape [D, tile_h, tile_h]."""
    K = wb.shape[1]
    j = jnp.arange(tile_h)[:, None]
    h = jnp.arange(tile_h)[None, :]
    k = j - h
    mask = ((k >= 0) & (k < K)).astype(wb.dtype)
    return wb[:, jnp.clip(k, 0, K - 1)] * mask[None]


def _toeplitz_tail(wb, tile_h, tail):
    """T[d, j', h] = ker[d, tile_h + j' - h] masked; shape [D, tail, tile_h]."""
    K = wb.shape[1]
    j = tile_h + jnp.arange(tail)[:, None]
    h = jnp.arange(tile_h)[None, :]
    k = j - h
    mask = ((k >= 0) & (k < K)).astype(wb.dtype)
    return wb[:, jnp.clip(k, 0, K - 1)] * mask[None]


def _fir_kernel_w_lanes(depth_ref, x_ref, tm_ref, tt_ref, out_ref):
    """Natural layout: H on sublanes (MXU M rows), W on lanes.

    depth_ref : SMEM int32[B]                  (scalar prefetch; index_maps only)
    x_ref     : VMEM bf16[1, hp, W]            zero-padded slab, hp = h_out + TAIL
    tm_ref    : VMEM bf16[1, tile_h, tile_h]   T^T main tile for the selected depth
    tt_ref    : VMEM bf16[1, tile_h, TAIL]     T^T tail tile (K-1 overhang)
    out_ref   : VMEM f32[1, h_out, W]
    """
    del depth_ref
    tile_h = tm_ref.shape[1]
    tail = tt_ref.shape[2]
    h_out = out_ref.shape[1]
    tm = tm_ref[0]
    tt = tt_ref[0]
    # Static unroll: every slice below is 8/128-tile aligned -> pure views.
    # TODO(synk): for very long H (n_tiles >= ~16) switch to lax.fori_loop
    # with pl.ds/pl.multiple_of to bound live ranges.
    for t in range(h_out // tile_h):
        lo = t * tile_h
        acc = jnp.dot(tm, x_ref[0, lo:lo + tile_h, :],
                      preferred_element_type=jnp.float32)
        acc += jnp.dot(tt, x_ref[0, lo + tile_h:lo + tile_h + tail, :],
                       preferred_element_type=jnp.float32)
        out_ref[0, lo:lo + tile_h, :] = acc


def _fir_kernel_h_lanes(depth_ref, x_ref, tm_ref, tt_ref, out_ref):
    """Lane-dense layout: W on sublanes (MXU M rows), H on the 128-lane axis.

    x_ref  : VMEM bf16[1, tile_w, hp]
    tm_ref : VMEM bf16[1, tile_h, tile_h]
    tt_ref : VMEM bf16[1, TAIL, tile_h]
    out_ref: VMEM f32[1, tile_w, h_out]
    """
    del depth_ref
    tile_h = tm_ref.shape[1]
    tail = tt_ref.shape[1]
    h_out = out_ref.shape[2]
    tm = tm_ref[0]
    tt = tt_ref[0]
    for t in range(h_out // tile_h):
        lo = t * tile_h                                  # multiple of 128
        acc = jnp.dot(x_ref[0, :, lo:lo + tile_h], tm,
                      preferred_element_type=jnp.float32)
        acc += jnp.dot(x_ref[0, :, lo + tile_h:lo + tile_h + tail], tt,
                       preferred_element_type=jnp.float32)
        out_ref[0, :, lo:lo + tile_h] = acc              # lane-aligned unmasked store


def _filtered_w_lanes(x, depth, wb):
    """W < 128: keep [B, H, W]; H on MXU rows -> full occupancy, no transpose."""
    B, _, H, W = x.shape
    K = wb.shape[1]
    pad = (K - 1) // 2
    TAIL = 64                                 # >= K-1, sublane-aligned tail window

    if H <= 512:
        tile_h = _round_up(H, 8)              # single tile, minimal round-up waste
    elif _round_up(H, 256) - H <= _round_up(H, 128) - H + H // 16:
        tile_h = 256
    else:
        tile_h = 128
    h_out = _round_up(H, tile_h)
    hp = h_out + TAIL

    xs = jnp.pad(x[:, 0].astype(jnp.bfloat16),
                 ((0, 0), (pad, hp - H - pad), (0, 0)))           # [B, hp, W]
    tm = jnp.swapaxes(_toeplitz_main(wb, tile_h), 1, 2).astype(jnp.bfloat16)
    tt = jnp.swapaxes(_toeplitz_tail(wb, tile_h, TAIL), 1, 2).astype(jnp.bfloat16)

    budget = _vmem_budget_bytes()
    step_bytes = hp * W * 2 + h_out * W * 4 + (tile_h + TAIL) * tile_h * 2

    grid_spec = pltpu.PrefetchScalarGridSpec(
        num_scalar_prefetch=1,                # depth indices -> SMEM
        grid=(B,),
        in_specs=[
            pl.BlockSpec((1, hp, W), lambda b, dref: (b, 0, 0)),
            # Only the selected depth's Toeplitz tiles are fetched per step.
            pl.BlockSpec((1, tile_h, tile_h), lambda b, dref: (dref[b], 0, 0)),
            pl.BlockSpec((1, tile_h, TAIL), lambda b, dref: (dref[b], 0, 0)),
        ],
        out_specs=pl.BlockSpec((1, h_out, W), lambda b, dref: (b, 0, 0)),
    )
    cost = pl.CostEstimate(
        flops=int(2 * B * h_out * W * (tile_h + TAIL)),
        transcendentals=0,
        bytes_accessed=int(xs.size * 2 + B * h_out * W * 4
                           + B * (tile_h + TAIL) * tile_h * 2))

    out = pl.pallas_call(
        _fir_kernel_w_lanes,
        out_shape=jax.ShapeDtypeStruct((B, h_out, W), jnp.float32),
        grid_spec=grid_spec,
        compiler_params=pltpu.CompilerParams(
            dimension_semantics=("parallel",),
            vmem_limit_bytes=_vmem_limit(step_bytes, budget)),
        cost_estimate=cost,
    )(depth, xs, tm, tt)
    return out[:, :H, :][:, None, :, :]


def _filtered_h_lanes(x, depth, wb):
    """W >= 128: [B, W, H] with H on the 128-lane axis; W tiled on inner grid axis."""
    B, _, H, W = x.shape
    K = wb.shape[1]
    pad = (K - 1) // 2
    TAIL = 128                                # lane-aligned K-1 overhang window

    waste256 = _round_up(H, 256) - H
    waste128 = _round_up(H, 128) - H
    tile_h = 256 if (H >= 1024 and waste256 <= waste128 + H // 16) else 128
    h_out = _round_up(H, tile_h)
    hp = h_out + TAIL

    budget = _vmem_budget_bytes()
    cands = [tw for tw in (512, 256, 128, 64, 32, 16, 8) if W % tw == 0] or [W]
    tile_w = cands[-1]
    for tw in cands:                          # largest W tile whose blocks fit VMEM
        if 2 * (tw * hp * 2 + tw * h_out * 4) <= (budget * 3) // 4:
            tile_w = tw
            break
    n_w = W // tile_w

    # bf16 BEFORE the transpose (halves layout-plumbing HBM traffic).
    # TODO(synk): allow_input_fusion could fold the transpose/pad into the
    # pallas_call operand; kept off to keep lowering robust.
    xt = jnp.transpose(x[:, 0].astype(jnp.bfloat16), (0, 2, 1))   # [B, W, H]
    xt = jnp.pad(xt, ((0, 0), (0, 0), (pad, hp - H - pad)))
    tm = _toeplitz_main(wb, tile_h).astype(jnp.bfloat16)          # [D, tile_h, tile_h]
    tt = _toeplitz_tail(wb, tile_h, TAIL).astype(jnp.bfloat16)    # [D, TAIL, tile_h]

    step_bytes = tile_w * hp * 2 + tile_w * h_out * 4 + (tile_h + TAIL) * tile_h * 2

    # Grid order: B outer, W-tiles inner.  The Toeplitz index_map depends only
    # on b, so its block is NOT re-DMA'd across the inner wi steps.
    grid_spec = pltpu.PrefetchScalarGridSpec(
        num_scalar_prefetch=1,
        grid=(B, n_w),
        in_specs=[
            pl.BlockSpec((1, tile_w, hp), lambda b, wi, dref: (b, wi, 0)),
            pl.BlockSpec((1, tile_h, tile_h), lambda b, wi, dref: (dref[b], 0, 0)),
            pl.BlockSpec((1, TAIL, tile_h), lambda b, wi, dref: (dref[b], 0, 0)),
        ],
        out_specs=pl.BlockSpec((1, tile_w, h_out), lambda b, wi, dref: (b, wi, 0)),
    )
    cost = pl.CostEstimate(
        flops=int(2 * B * W * h_out * (tile_h + TAIL)),
        transcendentals=0,
        bytes_accessed=int(xt.size * 2 + B * W * h_out * 4
                           + B * n_w * (tile_h + TAIL) * tile_h * 2))

    out_t = pl.pallas_call(
        _fir_kernel_h_lanes,
        out_shape=jax.ShapeDtypeStruct((B, W, h_out), jnp.float32),
        grid_spec=grid_spec,
        compiler_params=pltpu.CompilerParams(
            dimension_semantics=("parallel", "parallel"),
            vmem_limit_bytes=_vmem_limit(step_bytes, budget)),
        cost_estimate=cost,
    )(depth, xt, tm, tt)
    return jnp.transpose(out_t[:, :, :H], (0, 2, 1))[:, None, :, :]


def _filtered(x, depth, weight_bank):
    """Per-sample depth-selected FIR along H with 'same' zero padding."""
    B, C, H, W = x.shape
    assert C == 1, "module's conv2d kernel has a single in/out channel"
    wb = weight_bank.astype(jnp.float32)
    depth = jnp.clip(depth.astype(jnp.int32), 0, wb.shape[0] - 1)  # guard OOB DMA
    if W < 128:
        return _filtered_w_lanes(x, depth, wb)
    return _filtered_h_lanes(x, depth, wb)


def make_filter_bank(key, depth=Depth, filter_length=FILTER_LENGTH):
    """Deterministic synthetic stand-in for the firwin2-designed Wiener filters."""
    w = jax.random.normal(key, (depth, filter_length), dtype=jnp.float32)
    n = jnp.arange(filter_length, dtype=jnp.float32)
    hann = 0.5 - 0.5 * jnp.cos(2.0 * jnp.pi * n / (filter_length - 1))
    w = w * hann[None, :]
    w = w / (jnp.sum(jnp.abs(w), axis=1, keepdims=True) + 1e-8)
    return w


@functools.partial(jax.jit, static_argnames=("probability",))
def train_time_calibration_forward(x, y, depth, weight_bank, gate_key,
                                   probability=PROBABILITY):
    """Equivalent of train_time_calibration.forward(x, y, depth).

    With probability `probability` apply the per-sample depth-selected FIR
    filter along H; otherwise return x unchanged (kernel skipped via lax.cond).
    `y` is unused, as in the reference module.
    """
    del y
    x = x.astype(jnp.float32)
    apply_filter = jax.random.uniform(gate_key, ()) < probability
    return jax.lax.cond(
        apply_filter,
        lambda xx: _filtered(xx, depth, weight_bank),
        lambda xx: xx,
        x)


def _reference_fir(x, depth, weight_bank):
    """Plain-JAX reference (shifted-slice cross-correlation, 'same' padding)."""
    B, _, H, W = x.shape
    K = weight_bank.shape[1]
    pad = (K - 1) // 2
    xp = jnp.pad(x, ((0, 0), (0, 0), (pad, pad), (0, 0)))
    outs = []
    for b in range(B):
        ker = weight_bank[int(depth[b])]
        acc = jnp.zeros((H, W), jnp.float32)
        for k in range(K):
            acc = acc + xp[b, 0, k:k + H, :] * ker[k]
        outs.append(acc[None, None])
    return jnp.concatenate(outs, axis=0)


if __name__ == "__main__":
    key = jax.random.PRNGKey(0)
    k_x, k_y, k_w, k_gate, k_x2 = jax.random.split(key, 5)

    weight_bank = make_filter_bank(k_w)                          # [Depth, K]

    # Narrow-W path (natural layout: H on MXU rows, W on lanes).
    B, C, H, W = 2, 1, 64, 16
    x = jax.random.normal(k_x, (B, C, H, W), dtype=jnp.float32)
    y = jax.random.normal(k_y, (B, C, H, W), dtype=jnp.float32)  # unused, as in ref
    depth = jnp.array([0, 7], dtype=jnp.int32)

    filt = jax.jit(_filtered)(x, depth, weight_bank)
    ref = _reference_fir(x, depth, weight_bank)
    err = float(jnp.max(jnp.abs(filt - ref)))
    # bf16 MXU operands with f32 accumulation vs. pure-f32 reference.
    assert err < 2e-2, f"Pallas FIR (W<128 path) mismatch: max abs error = {err}"

    # Wide-W path (lane-dense layout: H on the 128-lane axis).
    W2 = 128
    x2 = jax.random.normal(k_x2, (B, C, H, W2), dtype=jnp.float32)
    depth2 = jnp.array([3, 8], dtype=jnp.int32)
    filt2 = jax.jit(_filtered)(x2, depth2, weight_bank)
    ref2 = _reference_fir(x2, depth2, weight_bank)
    err2 = float(jnp.max(jnp.abs(filt2 - ref2)))
    assert err2 < 2e-2, f"Pallas FIR (W>=128 path) mismatch: max abs error = {err2}"

    out = train_time_calibration_forward(x, y, depth, weight_bank, k_gate)
    jax.block_until_ready(out)
    assert out.shape == x.shape and out.dtype == jnp.float32
    print("KERNEL_OK")
</pallas_src>

<mosaic_0001>
module attributes {stable_mosaic.version = 11 : i64} {
  func.func @_fir_kernel_w_lanes(%arg0: i32, %arg1: memref<2xi32, #tpu.memory_space<smem>>, %arg2: memref<1x128x16xbf16, #tpu.memory_space<vmem>>, %arg3: memref<1x64x64xbf16, #tpu.memory_space<vmem>>, %arg4: memref<1x64x64xbf16, #tpu.memory_space<vmem>>, %arg5: memref<1x64x16xf32, #tpu.memory_space<vmem>>) attributes {dimension_semantics = [#tpu.dimension_semantics<parallel>], iteration_bounds = array<i64: 2>, scalar_prefetch = 1 : i64, scratch_operands = 0 : i64, tpu.core_type = #tpu.core_type<tc>, window_params = [{transform_indices = @transform_0, window_bounds = array<i64: 1, 128, 16>}, {transform_indices = @transform_1, window_bounds = array<i64: 1, 64, 64>}, {transform_indices = @transform_2, window_bounds = array<i64: 1, 64, 64>}, {transform_indices = @transform_3, window_bounds = array<i64: 1, 64, 16>}]} {
    %c0 = arith.constant 0 : index
    %c0_0 = arith.constant 0 : index
    %c0_1 = arith.constant 0 : index
    %0 = vector.load %arg3[%c0, %c0_0, %c0_1] : memref<1x64x64xbf16, #tpu.memory_space<vmem>>, vector<1x64x64xbf16>
    %1 = vector.shape_cast %0 : vector<1x64x64xbf16> to vector<64x64xbf16>
    %c0_2 = arith.constant 0 : index
    %c0_3 = arith.constant 0 : index
    %c0_4 = arith.constant 0 : index
    %2 = vector.load %arg4[%c0_2, %c0_3, %c0_4] : memref<1x64x64xbf16, #tpu.memory_space<vmem>>, vector<1x64x64xbf16>
    %3 = vector.shape_cast %2 : vector<1x64x64xbf16> to vector<64x64xbf16>
    %c0_5 = arith.constant 0 : index
    %c0_6 = arith.constant 0 : index
    %c0_7 = arith.constant 0 : index
    %4 = vector.load %arg2[%c0_5, %c0_6, %c0_7] : memref<1x128x16xbf16, #tpu.memory_space<vmem>>, vector<1x64x16xbf16>
    %5 = vector.shape_cast %4 : vector<1x64x16xbf16> to vector<64x16xbf16>
    %cst = arith.constant dense<0.000000e+00> : vector<64x16xf32>
    %6 = tpu.matmul %1, %5, %cst {dimension_numbers = #tpu.dot_dimension_numbers<[1], [0], [0], [1], [0, 0, 1, 1], [], []>} : vector<64x64xbf16>, vector<64x16xbf16>, vector<64x16xf32> -> vector<64x16xf32>
    %c0_8 = arith.constant 0 : index
    %c64 = arith.constant 64 : index
    %c0_9 = arith.constant 0 : index
    %7 = vector.load %arg2[%c0_8, %c64, %c0_9] : memref<1x128x16xbf16, #tpu.memory_space<vmem>>, vector<1x64x16xbf16>
    %8 = vector.shape_cast %7 : vector<1x64x16xbf16> to vector<64x16xbf16>
    %cst_10 = arith.constant dense<0.000000e+00> : vector<64x16xf32>
    %9 = tpu.matmul %3, %8, %cst_10 {dimension_numbers = #tpu.dot_dimension_numbers<[1], [0], [0], [1], [0, 0, 1, 1], [], []>} : vector<64x64xbf16>, vector<64x16xbf16>, vector<64x16xf32> -> vector<64x16xf32>
    %10 = arith.addf %6, %9 : vector<64x16xf32>
    %c0_11 = arith.constant 0 : index
    %c0_12 = arith.constant 0 : index
    %c0_13 = arith.constant 0 : index
    %11 = vector.load %arg5[%c0_11, %c0_12, %c0_13] : memref<1x64x16xf32, #tpu.memory_space<vmem>>, vector<1x64x16xf32>
    %12 = vector.shape_cast %11 : vector<1x64x16xf32> to vector<64x16xf32>
    %13 = vector.shape_cast %10 : vector<64x16xf32> to vector<1x64x16xf32>
    tpu.vector_store %arg5[%c0_11, %c0_12, %c0_13], %13 {strides = array<i32>} : memref<1x64x16xf32, #tpu.memory_space<vmem>>, vector<1x64x16xf32>,
    return
  }
  func.func @transform_0(%arg0: i32, %arg1: memref<2xi32, #tpu.memory_space<smem>>) -> (i32, i32, i32) {
    %c0_i32 = arith.constant 0 : i32
    %c0_i32_0 = arith.constant 0 : i32
    %c0_i32_1 = arith.constant 0 : i32
    return %arg0, %c0_i32, %c0_i32_0 : i32, i32, i32
  }
  func.func @transform_1(%arg0: i32, %arg1: memref<2xi32, #tpu.memory_space<smem>>) -> (i32, i32, i32) {
    %0 = arith.index_cast %arg0 : i32 to index
    %1 = memref.load %arg1[%0] : memref<2xi32, #tpu.memory_space<smem>>
    %c0_i32 = arith.constant 0 : i32
    %c0_i32_0 = arith.constant 0 : i32
    %c0_i32_1 = arith.constant 0 : i32
    return %1, %c0_i32, %c0_i32_0 : i32, i32, i32
  }
  func.func @transform_2(%arg0: i32, %arg1: memref<2xi32, #tpu.memory_space<smem>>) -> (i32, i32, i32) {
    %0 = arith.index_cast %arg0 : i32 to index
    %1 = memref.load %arg1[%0] : memref<2xi32, #tpu.memory_space<smem>>
    %c0_i32 = arith.constant 0 : i32
    %c0_i32_0 = arith.constant 0 : i32
    %c0_i32_1 = arith.constant 0 : i32
    return %1, %c0_i32, %c0_i32_0 : i32, i32, i32
  }
  func.func @transform_3(%arg0: i32, %arg1: memref<2xi32, #tpu.memory_space<smem>>) -> (i32, i32, i32) {
    %c0_i32 = arith.constant 0 : i32
    %c0_i32_0 = arith.constant 0 : i32
    %c0_i32_1 = arith.constant 0 : i32
    return %arg0, %c0_i32, %c0_i32_0 : i32, i32, i32
  }
}

</mosaic_0001>

<llo_original>
// kernel: _filtered.1
$region0: #{_filtered.1}
  #allocation0 [shape = 'u32[]', space=smem, size = 0x4, offset = 0x4, fixed_abs, tag = 'smem constant byte address 0x4 - core index']
  #allocation1 [shape = 'u32[144,128]{1,0:T(1,128)}', space=vmem, size = 0x12000, scoped, tag = 'internal scratch']
  #allocation2 [shape = 's32[1]{0}', space=sflag, size = 0x4, scoped, tag = 'scoped memory for _filtered.1']
  #allocation3 [shape = 'u8[512]{0}', space=smem, size = 0x200, scoped, tag = 'prefetched SMEM operand 0']
  %s0 = inlined_call_operand.vmem [shape: s32[2], index: 0, kind: input, shape index: {}]
  %s1 = inlined_call_operand.vmem [shape: bf16[2,128,16], index: 1, kind: input, shape index: {}]
  %s2 = inlined_call_operand.vmem [shape: bf16[9,64,64], index: 2, kind: input, shape index: {}]
  %s3 = inlined_call_operand.vmem [shape: bf16[9,64,64], index: 3, kind: input, shape index: {}]
  %s4 = inlined_call_operand.vmem [shape: f32[2,64,16], index: 4, kind: output, shape index: {}]
  %s5 = sld [smem:[#allocation0]]
  $region45: #{_filtered.1} parent=0
    _
  %s7 = ssub.s32 1, %s5
  %s8 = scalar_select 0, %s7, %s5
  %s9 = sshll.u32 %s0, 4
  %s10 = int_to_ptr.vmem [resolvable:$true] %s9
  %12 = dma.vmem_to_smem %s10, 16, [#allocation3], [#allocation2]
  %13 = dma.done [#allocation2], 16
  %14 = sfence
  loop: start=0, step=1, limit=4
  $region2: #{_filtered.1} parent=0 // loop_pre_header
    _
  $region3: #{_filtered.1} parent=0 // loop_header
    %s16 = sphi 0, %s20
    %p17 = scmp.ge.s32.totalorder %s16, 4
    %s26 = sphi 0, %s28
    %s29 = sphi 0, %s26
    %s30 = sphi 0, %s29
    %s46 = sphi 0, %s30
    %s54 = sphi 0, %s56
    %s57 = sphi 0, %s54
    %s58 = sphi 0, %s57
    %s74 = sphi 0, %s58
    %s82 = sphi 0, %s84
    %s85 = sphi 0, %s82
    %s86 = sphi 0, %s85
    %s102 = sphi 0, %s86
    %s108 = sphi 0, %s110
    %s111 = sphi 0, %s108
    %s112 = sphi 0, %s111
    %s128 = sphi 0, %s112
  $region4: #{_filtered.1} parent=0 // loop_header_branch
    %19 = sbr.rel (%p17) target = $region8
  $region5: #{_filtered.1} parent=0 // loop_body
    %s21 = ssub.s32 %s16, 1
    %s22 = ssub.s32 %s16, 2
    %s23 = sadd.s32 %s16, 1
    %s24 = ssub.s32 %s16, %s23
    %p25 = scmp.eq.s32.totalorder %s24, 0
    %s27 = sadd.s32 %s26, 1
    %s28 = scalar_select %p25, %s26, %s27
    %p31 = pneg %p25
    %p32 = scmp.eq.s32.totalorder %s16, 1
    %p33 = por %p31, %p32
    %p34 = scmp.ne.s32.totalorder %s26, %s29
    %p35 = scmp.eq.s32.totalorder %s16, 0
    %p36 = por %p34, %p35
    %p37 = scmp.ne.s32.totalorder %s26, %s29
    %p38 = scmp.eq.s32.totalorder %s21, 1
    %p39 = por %p37, %p38
    %p40 = scmp.ne.s32.totalorder %s29, %s30
    %p41 = scmp.eq.s32.totalorder %s21, 0
    %p42 = por %p40, %p41
    %p43 = scmp.ne.s32.totalorder %s29, %s30
    %p44 = scmp.eq.s32.totalorder %s22, 1
    %p45 = por %p43, %p44
    %p47 = scmp.ne.s32.totalorder %s30, %s46
    %p48 = scmp.eq.s32.totalorder %s22, 0
    %p49 = por %p47, %p48
    %s50 = sld [smem:[#allocation3 + %s16]]
    %s51 = sld [smem:[#allocation3 + %s23]]
    %s52 = ssub.s32 %s50, %s51
    %p53 = scmp.eq.s32.totalorder %s52, 0
    %s55 = sadd.s32 %s54, 1
    %s56 = scalar_select %p53, %s54, %s55
    %p59 = pneg %p53
    %p60 = scmp.eq.s32.totalorder %s16, 1
    %p61 = por %p59, %p60
    %p62 = scmp.ne.s32.totalorder %s54, %s57
    %p63 = scmp.eq.s32.totalorder %s16, 0
    %p64 = por %p62, %p63
    %p65 = scmp.ne.s32.totalorder %s54, %s57
    %p66 = scmp.eq.s32.totalorder %s21, 1
    %p67 = por %p65, %p66
    %p68 = scmp.ne.s32.totalorder %s57, %s58
    %p69 = scmp.eq.s32.totalorder %s21, 0
    %p70 = por %p68, %p69
    %p71 = scmp.ne.s32.totalorder %s57, %s58
    %p72 = scmp.eq.s32.totalorder %s22, 1
    %p73 = por %p71, %p72
    %p75 = scmp.ne.s32.totalorder %s58, %s74
    %p76 = scmp.eq.s32.totalorder %s22, 0
    %p77 = por %p75, %p76
    %s78 = sld [smem:[#allocation3 + %s16]]
    %s79 = sld [smem:[#allocation3 + %s23]]
    %s80 = ssub.s32 %s78, %s79
    %p81 = scmp.eq.s32.totalorder %s80, 0
    %s83 = sadd.s32 %s82, 1
    %s84 = scalar_select %p81, %s82, %s83
    %p87 = pneg %p81
    %p88 = scmp.eq.s32.totalorder %s16, 1
    %p89 = por %p87, %p88
    %p90 = scmp.ne.s32.totalorder %s82, %s85
    %p91 = scmp.eq.s32.totalorder %s16, 0
    %p92 = por %p90, %p91
    %p93 = scmp.ne.s32.totalorder %s82, %s85
    %p94 = scmp.eq.s32.totalorder %s21, 1
    %p95 = por %p93, %p94
    %p96 = scmp.ne.s32.totalorder %s85, %s86
    %p97 = scmp.eq.s32.totalorder %s21, 0
    %p98 = por %p96, %p97
    %p99 = scmp.ne.s32.totalorder %s85, %s86
    %p100 = scmp.eq.s32.totalorder %s22, 1
    %p101 = por %p99, %p100
    %p103 = scmp.ne.s32.totalorder %s86, %s102
    %p104 = scmp.eq.s32.totalorder %s22, 0
    %p105 = por %p103, %p104
    %s106 = ssub.s32 %s16, %s23
    %p107 = scmp.eq.s32.totalorder %s106, 0
    %s109 = sadd.s32 %s108, 1
    %s110 = scalar_select %p107, %s108, %s109
    %p113 = pneg %p107
    %p114 = scmp.eq.s32.totalorder %s16, 1
    %p115 = por %p113, %p114
    %p116 = scmp.ne.s32.totalorder %s108, %s111
    %p117 = scmp.eq.s32.totalorder %s16, 0
    %p118 = por %p116, %p117
    %p119 = scmp.ne.s32.totalorder %s108, %s111
    %p120 = scmp.eq.s32.totalorder %s21, 1
    %p121 = por %p119, %p120
    %p122 = scmp.ne.s32.totalorder %s111, %s112
    %p123 = scmp.eq.s32.totalorder %s21, 0
    %p124 = por %p122, %p123
    %p125 = scmp.ne.s32.totalorder %s111, %s112
    %p126 = scmp.eq.s32.totalorder %s22, 1
    %p127 = por %p125, %p126
    %p129 = scmp.ne.s32.totalorder %s112, %s128
    %p130 = scmp.eq.s32.totalorder %s22, 0
    %p131 = por %p129, %p130
    %p132 = scmp.le.s32.totalorder 1, %s16
    %p133 = scmp.lt.s32.totalorder %s16, 3
    %p134 = pnand %p132, %p133
    %p135 = pneg %p134
    // Predicated region
    $region9: #{_filtered.1} parent=5 // pred_check
      _
    $region10: #{_filtered.1} parent=5 // pred_check_branch
      %137 = sbr.rel (%p134) target = $region12
    $region11: #{_filtered.1} parent=5 // pred_region
      %s138 = ssub.s32 %s16, 1
    $region12: #{_filtered.1} parent=5 // pred_fallthru
      _
    %p139 = scmp.lt.s32.totalorder %s16, 2
    // Predicated region
    $region13: #{_filtered.1} parent=5 // pred_check
      %p140 = pneg %p139
    $region14: #{_filtered.1} parent=5 // pred_check_branch
      %142 = sbr.rel (%p140) target = $region16
    $region15: #{_filtered.1} parent=5 // pred_region
      // Predicated region
      $region17: #{_filtered.1} parent=15 // pred_check
        %p143 = pneg %p36
      $region18: #{_filtered.1} parent=15 // pred_check_branch
        %145 = sbr.rel (%p143) target = $region20
      $region19: #{_filtered.1} parent=15 // pred_region
        %p146 = scmp.lt.s32.totalorder %s16, 1
        %s147 = scalar_select %p146, %s16, 1
        %s148 = smul.addr %s147, 16
        %s149 = smul.addr %s148, 4
        %s150 = scalar_lea.vmem %s1, %s149
      $region20: #{_filtered.1} parent=15 // pred_fallthru
        _
      // Predicated region
      $region21: #{_filtered.1} parent=15 // pred_check
        %p151 = pneg %p64
      $region22: #{_filtered.1} parent=15 // pred_check_branch
        %153 = sbr.rel (%p151) target = $region24
      $region23: #{_filtered.1} parent=15 // pred_region
        %s154 = sld [smem:[#allocation3 + %s16]]
        %p155 = scmp.lt.s32.totalorder %s154, 8
        %s156 = scalar_select %p155, %s154, 8
        %s157 = smul.addr %s156, 8
        %s158 = smul.addr %s157, 4
        %s159 = scalar_lea.vmem %s2, %s158
        %s160 = sld [smem:[#allocation3 + %s16]]
      $region24: #{_filtered.1} parent=15 // pred_fallthru
        _
      // Predicated region
      $region25: #{_filtered.1} parent=15 // pred_check
        %p161 = pneg %p92
      $region26: #{_filtered.1} parent=15 // pred_check_branch
        %163 = sbr.rel (%p161) target = $region28
      $region27: #{_filtered.1} parent=15 // pred_region
        %s164 = sld [smem:[#allocation3 + %s16]]
        %p165 = scmp.lt.s32.totalorder %s164, 8
        %s166 = scalar_select %p165, %s164, 8
        %s167 = smul.addr %s166, 8
        %s168 = smul.addr %s167, 4
        %s169 = scalar_lea.vmem %s3, %s168
        %s170 = sld [smem:[#allocation3 + %s16]]
      $region28: #{_filtered.1} parent=15 // pred_fallthru
        _
    $region16: #{_filtered.1} parent=5 // pred_fallthru
      _
    %p171 = scmp.le.s32.totalorder 1, %s16
    %p172 = scmp.lt.s32.totalorder %s16, 3
    %p173 = pnand %p171, %p172
    %p174 = pneg %p173
    // Predicated region
    $region29: #{_filtered.1} parent=5 // pred_check
      _
    $region30: #{_filtered.1} parent=5 // pred_check_branch
      %176 = sbr.rel (%p173) target = $region32
    $region31: #{_filtered.1} parent=5 // pred_region
      %s177 = ssub.s32 %s16, 1
      %p178 = scmp.lt.s32.totalorder %s21, 1
      %s179 = scalar_select %p178, %s21, 1
      %s180 = smul.addr %s179, 16
      %s181 = smul.addr %s180, 4
      %s182 = scalar_lea.vmem %s1, %s181
      %p183 = pneg %p42
      %p184 = pneg %p39
      %s185 = sld [smem:[#allocation3 + %s21]]
      %p186 = scmp.lt.s32.totalorder %s185, 8
      %s187 = scalar_select %p186, %s185, 8
      %s188 = smul.addr %s187, 8
      %s189 = smul.addr %s188, 4
      %s190 = scalar_lea.vmem %s2, %s189
      %p191 = pneg %p70
      %p192 = pneg %p67
      %s193 = sld [smem:[#allocation3 + %s21]]
      %p194 = scmp.lt.s32.totalorder %s193, 8
      %s195 = scalar_select %p194, %s193, 8
      %s196 = smul.addr %s195, 8
      %s197 = smul.addr %s196, 4
      %s198 = scalar_lea.vmem %s3, %s197
      %p199 = pneg %p98
      %p200 = pneg %p95
      %p201 = pneg %p124
      %p202 = pneg %p121
      %p203 = scmp.lt.s32.totalorder %s21, 1
      %s204 = scalar_select %p203, %s21, 1
      %s205 = smul.addr %s204, 8
      %s206 = smul.addr %s205, 8
      %s207 = scalar_lea.vmem %s4, %s206
      %p208 = scmp.lt.s32.totalorder %s21, 1
      %s209 = scalar_select %p208, %s21, 1
      %s210 = smul.addr %s209, 16
      %s211 = smul.addr %s210, 4
      %s212 = scalar_lea.vmem %s1, %s211
      %s213 = sld [smem:[#allocation3 + %s21]]
      %p214 = scmp.lt.s32.totalorder %s213, 8
      %s215 = scalar_select %p214, %s213, 8
      %s216 = smul.addr %s215, 8
      %s217 = smul.addr %s216, 4
      %s218 = scalar_lea.vmem %s2, %s217
      %s219 = sld [smem:[#allocation3 + %s21]]
      %s220 = sld [smem:[#allocation3 + %s21]]
      %p221 = scmp.lt.s32.totalorder %s220, 8
      %s222 = scalar_select %p221, %s220, 8
      %s223 = smul.addr %s222, 8
      %s224 = smul.addr %s223, 4
      %s225 = scalar_lea.vmem %s3, %s224
      %s226 = sld [smem:[#allocation3 + %s21]]
      %p227 = scmp.lt.s32.totalorder %s21, 1
      %s228 = scalar_select %p227, %s21, 1
      %s229 = smul.addr %s228, 8
      %s230 = smul.addr %s229, 8
      %s231 = scalar_lea.vmem %s4, %s230
      %v233 = vld [vmem:[%s218] sm:$0xf]
      %v234 = vld [vmem:[%s218 + $0x4] sm:$0xf]
      %v235 = vld [vmem:[%s218 + $0x8] sm:$0xf]
      %v236 = vld [vmem:[%s218 + $0xc] sm:$0xf]
      %v237 = vld [vmem:[%s218 + $0x10] sm:$0xf]
      %v238 = vld [vmem:[%s218 + $0x14] sm:$0xf]
      %v239 = vld [vmem:[%s218 + $0x18] sm:$0xf]
      %v240 = vld [vmem:[%s218 + $0x1c] sm:$0xf]
      %v241 = vld [vmem:[%s225] sm:$0xf]
      %v242 = vld [vmem:[%s225 + $0x4] sm:$0xf]
      %v243 = vld [vmem:[%s225 + $0x8] sm:$0xf]
      %v244 = vld [vmem:[%s225 + $0xc] sm:$0xf]
      %v245 = vld [vmem:[%s225 + $0x10] sm:$0xf]
      %v246 = vld [vmem:[%s225 + $0x14] sm:$0xf]
      %v247 = vld [vmem:[%s225 + $0x18] sm:$0xf]
      %v248 = vld [vmem:[%s225 + $0x1c] sm:$0xf]
      %v249 = vld [vmem:[%s212] sm:$0xf]
      %v250 = vld [vmem:[%s212 + $0x4] sm:$0xf]
      %v251 = vld [vmem:[%s212 + $0x8] sm:$0xf]
      %v252 = vld [vmem:[%s212 + $0xc] sm:$0xf]
      %v253 = vld [vmem:[%s212 + $0x10] sm:$0xf]
      %v254 = vld [vmem:[%s212 + $0x14] sm:$0xf]
      %v255 = vld [vmem:[%s212 + $0x18] sm:$0xf]
      %v256 = vld [vmem:[%s212 + $0x1c] sm:$0xf]
      %v257 = vld [vmem:[%s212 + $0x20] sm:$0xf]
      %v258 = vld [vmem:[%s212 + $0x24] sm:$0xf]
      %v259 = vld [vmem:[%s212 + $0x28] sm:$0xf]
      %v260 = vld [vmem:[%s212 + $0x2c] sm:$0xf]
      %v261 = vld [vmem:[%s212 + $0x30] sm:$0xf]
      %v262 = vld [vmem:[%s212 + $0x34] sm:$0xf]
      %v263 = vld [vmem:[%s212 + $0x38] sm:$0xf]
      %v264 = vld [vmem:[%s212 + $0x3c] sm:$0xf]
      %v273 = vunpack.c.l.b16 %v241
      %v274 = vunpack.c.l.b16 %v242
      %v275 = vunpack.c.l.b16 %v243
      %v276 = vunpack.c.l.b16 %v244
      %v277 = vunpack.c.l.b16 %v245
      %v278 = vunpack.c.l.b16 %v246
      %v279 = vunpack.c.l.b16 %v247
      %v280 = vunpack.c.l.b16 %v248
      %v281 = vpack.c.b16 %v274, %v273
      %v282 = vpack.c.b16 %v276, %v275
      %v283 = vpack.c.b16 %v278, %v277
      %v284 = vpack.c.b16 %v280, %v279
      %v293 = vunpack.c.l.b16 %v257
      %v294 = vunpack.c.l.b16 %v258
      %v295 = vunpack.c.l.b16 %v259
      %v296 = vunpack.c.l.b16 %v260
      %v297 = vunpack.c.l.b16 %v261
      %v298 = vunpack.c.l.b16 %v262
      %v299 = vunpack.c.l.b16 %v263
      %v300 = vunpack.c.l.b16 %v264
      %v301 = vpack.c.b16 %v294, %v293
      %v302 = vpack.c.b16 %v296, %v295
      %v303 = vpack.c.b16 %v298, %v297
      %v304 = vpack.c.b16 %v300, %v299
      %vm309 = vcmask 523264
      %v311 = vsel %vm309, %v281, 0
      %v314 = vsel %vm309, %v282, 0
      %v317 = vsel %vm309, %v283, 0
      %v320 = vsel %vm309, %v284, 0
      %322 = vmatprep.subr.bf16.mxu0 0
      %323 = vmatpush1.bf16.msra.mxu0 0
      %324 = vmatprep.subr.bf16.mxu0 0
      %325 = vmatpush1.bf16.msra.mxu0 0
      %326 = vmatprep.subr.bf16.mxu0 0
      %327 = vmatpush1.bf16.msra.mxu0 0
      %328 = vmatprep.subr.bf16.mxu0 0
      %329 = vmatpush1.bf16.msra.mxu0 0
      %330 = vmatprep.subr.bf16.mxu0 0
      %331 = vmatpush1.bf16.msra.mxu0 %v304
      %332 = vmatprep.subr.bf16.mxu0 0
      %333 = vmatpush1.bf16.msra.mxu0 %v303
      %334 = vmatprep.subr.bf16.mxu0 0
      %335 = vmatpush1.bf16.msra.mxu0 %v302
      %336 = vmatprep.subr.bf16.mxu0 0
      %337 = vmatpush1.bf16.msra.mxu0 %v301
      %338 = vmatprep.subr.bf16.mxu0 0
      %339 = vmatpush2.bf16.msra.mxu0 0
      %340 = vmatprep.subr.bf16.mxu0 0
      %341 = vmatpush2.bf16.msra.mxu0 0
      %342 = vmatprep.subr.bf16.mxu0 0
      %343 = vmatpush2.bf16.msra.mxu0 0
      %344 = vmatprep.subr.bf16.mxu0 0
      %345 = vmatpush2.bf16.msra.mxu0 0
      %346 = vmatprep.subr.bf16.mxu0 0
      %347 = vmatpush2.bf16.msra.mxu0 0
      %348 = vmatprep.subr.bf16.mxu0 0
      %349 = vmatpush2.bf16.msra.mxu0 0
      %350 = vmatprep.subr.bf16.mxu0 0
      %351 = vmatpush2.bf16.msra.mxu0 0
      %352 = vmatprep.subr.bf16.mxu0 0
      %353 = vmatpush2.bf16.msra.mxu0 0
      %354 = vmatprep.mubr.bf16.mxu0 0
      %355 = vmatmul.mubr.bf16.gmra.mxu0 %v311
      %v356 = vpop.f32.mrf.mxu0
      %v357 = vadd.f32 0.0, %v356
      %v358 = vpop.f32.mrf.mxu0
      %v359 = vpop.f32.mrf.mxu0
      %v360 = vadd.f32 0.0, %v359
      %v361 = vpop.f32.mrf.mxu0
      %362 = vmatprep.mubr.bf16.mxu0 0
      %363 = vmatmul.mubr.bf16.gmra.mxu0 %v314
      %v364 = vpop.f32.mrf.mxu0
      %v365 = vadd.f32 0.0, %v364
      %v366 = vpop.f32.mrf.mxu0
      %v367 = vpop.f32.mrf.mxu0
      %v368 = vadd.f32 0.0, %v367
      %v369 = vpop.f32.mrf.mxu0
      %370 = vmatprep.mubr.bf16.mxu0 0
      %371 = vmatmul.mubr.bf16.gmra.mxu0 %v317
      %v372 = vpop.f32.mrf.mxu0
      %v373 = vadd.f32 0.0, %v372
      %v374 = vpop.f32.mrf.mxu0
      %v375 = vpop.f32.mrf.mxu0
      %v376 = vadd.f32 0.0, %v375
      %v377 = vpop.f32.mrf.mxu0
      %378 = vmatprep.mubr.bf16.mxu0 0
      %379 = vmatmul.mubr.bf16.gmra.mxu0 %v320
      %v380 = vpop.f32.mrf.mxu0
      %v381 = vadd.f32 0.0, %v380
      %v382 = vpop.f32.mrf.mxu0
      %v383 = vpop.f32.mrf.mxu0
      %v384 = vadd.f32 0.0, %v383
      %v385 = vpop.f32.mrf.mxu0
      %386 = vdwg.mxu0
      %v395 = vunpack.c.l.b16 %v233
      %v396 = vunpack.c.l.b16 %v234
      %v397 = vunpack.c.l.b16 %v235
      %v398 = vunpack.c.l.b16 %v236
      %v399 = vunpack.c.l.b16 %v237
      %v400 = vunpack.c.l.b16 %v238
      %v401 = vunpack.c.l.b16 %v239
      %v402 = vunpack.c.l.b16 %v240
      %v403 = vpack.c.b16 %v396, %v395
      %v404 = vpack.c.b16 %v398, %v397
      %v405 = vpack.c.b16 %v400, %v399
      %v406 = vpack.c.b16 %v402, %v401
      %v415 = vunpack.c.l.b16 %v249
      %v416 = vunpack.c.l.b16 %v250
      %v417 = vunpack.c.l.b16 %v251
      %v418 = vunpack.c.l.b16 %v252
      %v419 = vunpack.c.l.b16 %v253
      %v420 = vunpack.c.l.b16 %v254
      %v421 = vunpack.c.l.b16 %v255
      %v422 = vunpack.c.l.b16 %v256
      %v423 = vpack.c.b16 %v416, %v415
      %v424 = vpack.c.b16 %v418, %v417
      %v425 = vpack.c.b16 %v420, %v419
      %v426 = vpack.c.b16 %v422, %v421
      %v432 = vsel %vm309, %v403, 0
      %v435 = vsel %vm309, %v404, 0
      %v438 = vsel %vm309, %v405, 0
      %v441 = vsel %vm309, %v406, 0
      %443 = vmatprep.subr.bf16.mxu0 0
      %444 = vmatpush1.bf16.msra.mxu0 0
      %445 = vmatprep.subr.bf16.mxu0 0
      %446 = vmatpush1.bf16.msra.mxu0 0
      %447 = vmatprep.subr.bf16.mxu0 0
      %448 = vmatpush1.bf16.msra.mxu0 0
      %449 = vmatprep.subr.bf16.mxu0 0
      %450 = vmatpush1.bf16.msra.mxu0 0
      %451 = vmatprep.subr.bf16.mxu0 0
      %452 = vmatpush1.bf16.msra.mxu0 %v426
      %453 = vmatprep.subr.bf16.mxu0 0
      %454 = vmatpush1.bf16.msra.mxu0 %v425
      %455 = vmatprep.subr.bf16.mxu0 0
      %456 = vmatpush1.bf16.msra.mxu0 %v424
      %457 = vmatprep.subr.bf16.mxu0 0
      %458 = vmatpush1.bf16.msra.mxu0 %v423
      %459 = vmatprep.subr.bf16.mxu0 0
      %460 = vmatpush2.bf16.msra.mxu0 0
      %461 = vmatprep.subr.bf16.mxu0 0
      %462 = vmatpush2.bf16.msra.mxu0 0
      %463 = vmatprep.subr.bf16.mxu0 0
      %464 = vmatpush2.bf16.msra.mxu0 0
      %465 = vmatprep.subr.bf16.mxu0 0
      %466 = vmatpush2.bf16.msra.mxu0 0
      %467 = vmatprep.subr.bf16.mxu0 0
      %468 = vmatpush2.bf16.msra.mxu0 0
      %469 = vmatprep.subr.bf16.mxu0 0
      %470 = vmatpush2.bf16.msra.mxu0 0
      %471 = vmatprep.subr.bf16.mxu0 0
      %472 = vmatpush2.bf16.msra.mxu0 0
      %473 = vmatprep.subr.bf16.mxu0 0
      %474 = vmatpush2.bf16.msra.mxu0 0
      %475 = vmatprep.mubr.bf16.mxu0 0
      %476 = vmatmul.mubr.bf16.gmra.mxu0 %v432
      %v477 = vpop.f32.mrf.mxu0
      %v478 = vadd.f32 %v357, %v477
      %v479 = vpop.f32.mrf.mxu0
      %v480 = vpop.f32.mrf.mxu0
      %v481 = vadd.f32 %v360, %v480
      %v482 = vpop.f32.mrf.mxu0
      %483 = vmatprep.mubr.bf16.mxu0 0
      %484 = vmatmul.mubr.bf16.gmra.mxu0 %v435
      %v485 = vpop.f32.mrf.mxu0
      %v486 = vadd.f32 %v365, %v485
      %v487 = vpop.f32.mrf.mxu0
      %v488 = vpop.f32.mrf.mxu0
      %v489 = vadd.f32 %v368, %v488
      %v490 = vpop.f32.mrf.mxu0
      %491 = vmatprep.mubr.bf16.mxu0 0
      %492 = vmatmul.mubr.bf16.gmra.mxu0 %v438
      %v493 = vpop.f32.mrf.mxu0
      %v494 = vadd.f32 %v373, %v493
      %v495 = vpop.f32.mrf.mxu0
      %v496 = vpop.f32.mrf.mxu0
      %v497 = vadd.f32 %v376, %v496
      %v498 = vpop.f32.mrf.mxu0
      %499 = vmatprep.mubr.bf16.mxu0 0
      %500 = vmatmul.mubr.bf16.gmra.mxu0 %v441
      %v501 = vpop.f32.mrf.mxu0
      %v502 = vadd.f32 %v381, %v501
      %v503 = vpop.f32.mrf.mxu0
      %v504 = vpop.f32.mrf.mxu0
      %v505 = vadd.f32 %v384, %v504
      %v506 = vpop.f32.mrf.mxu0
      %507 = vdwg.mxu0
      %vm508 = vcmask 130048
      %509 = vst.msk [vmem:[%s231] sm:$0xff] %vm508, %v478
      %510 = vst.msk [vmem:[%s231 + $0x8] sm:$0xff] %vm508, %v481
      %511 = vst.msk [vmem:[%s231 + $0x10] sm:$0xff] %vm508, %v486
      %512 = vst.msk [vmem:[%s231 + $0x18] sm:$0xff] %vm508, %v489
      %513 = vst.msk [vmem:[%s231 + $0x20] sm:$0xff] %vm508, %v494
      %514 = vst.msk [vmem:[%s231 + $0x28] sm:$0xff] %vm508, %v497
      %515 = vst.msk [vmem:[%s231 + $0x30] sm:$0xff] %vm508, %v502
      %516 = vst.msk [vmem:[%s231 + $0x38] sm:$0xff] %vm508, %v505
      %p517 = scmp.lt.s32.totalorder %s21, 1
      %s518 = scalar_select %p517, %s21, 1
      %s519 = smul.addr %s518, 8
      %s520 = smul.addr %s519, 8
      %s521 = scalar_lea.vmem %s4, %s520
      // Predicated region
      $region33: #{_filtered.1} parent=31 // pred_check
        %p522 = pneg %p121
      $region34: #{_filtered.1} parent=31 // pred_check_branch
        %524 = sbr.rel (%p522) target = $region36
      $region35: #{_filtered.1} parent=31 // pred_region
        _
      $region36: #{_filtered.1} parent=31 // pred_fallthru
        _
    $region32: #{_filtered.1} parent=5 // pred_fallthru
      _
    %p525 = scmp.le.s32.totalorder 2, %s16
    // Predicated region
    $region37: #{_filtered.1} parent=5 // pred_check
      %p526 = pneg %p525
    $region38: #{_filtered.1} parent=5 // pred_check_branch
      %528 = sbr.rel (%p526) target = $region40
    $region39: #{_filtered.1} parent=5 // pred_region
      %s529 = ssub.s32 %s16, 2
      // Predicated region
      $region41: #{_filtered.1} parent=39 // pred_check
        %p530 = pneg %p127
      $region42: #{_filtered.1} parent=39 // pred_check_branch
        %532 = sbr.rel (%p530) target = $region44
      $region43: #{_filtered.1} parent=39 // pred_region
        %p533 = scmp.lt.s32.totalorder %s22, 1
        %s534 = scalar_select %p533, %s22, 1
        %s535 = smul.addr %s534, 8
        %s536 = smul.addr %s535, 8
        %s537 = scalar_lea.vmem %s4, %s536
      $region44: #{_filtered.1} parent=39 // pred_fallthru
        _
    $region40: #{_filtered.1} parent=5 // pred_fallthru
      _
  $region6: #{_filtered.1} parent=0 // loop_footer
    %s20 = sadd.s32 1, %s16
  $region7: #{_filtered.1} parent=0 // loop_footer_branch
    %15 = sbr.rel target = $region3
  $region8: #{_filtered.1} parent=0 // loop_exit
    _

</llo_original>
